<compile_context>
chip_gen: v7x
topology: tpu7x:2x2x1
jax: 0.10.0
libtpu: 0.0.40
codegen_flags: <defaults>
</compile_context>

<pallas_src>
import functools

import numpy as np
import jax
import jax.numpy as jnp
from jax.experimental import pallas as pl
from jax.experimental.pallas import tpu as pltpu


def _decoder_kernel(x_ref, p_ref, o_ref, *, K, F, step, inv_L):
    """One BC tile of the fused avg-pool + overlap_and_add.

    x_ref: [K, TILE_BC, N]   operand dtype (f32 or bf16)
    p_ref: [N, F]            constant 0/1 pooling matrix, same dtype as x
    o_ref: [TILE_BC, T_pad]  float32, lane-dense (T_pad % 128 == 0)
    """
    o_ref[...] = jnp.zeros_like(o_ref)
    p = p_ref[...]                       # hoisted: loaded once per tile
    # K is a trace-time constant; the loop unrolls statically, so every output
    # slice below has a static lane offset (k * step).
    for k in range(K):
        pooled = jnp.dot(x_ref[k], p, preferred_element_type=jnp.float32)
        s = k * step
        o_ref[:, s:s + F] += pooled      # overlap_and_add: static-offset RMW
    o_ref[...] = o_ref[...] * inv_L      # single AvgPool 1/L scale at the end


@functools.lru_cache(maxsize=None)
def _pool_matrix(N, L, F, dtype_name):
    # P[n, f] = 1 iff AvgPool window f covers feature n (n < F*L); 0/1 values
    # are exact in any float dtype.  Built host-side, cached across calls.
    p = np.zeros((N, F), dtype=np.float32)
    n = np.arange(F * L)
    p[n, n // L] = 1.0
    return jnp.asarray(p, dtype=jnp.dtype(dtype_name))


def _choose_tile_bc(bc):
    if bc <= 8:
        return bc
    # Aim for >= 2 grid tiles so multi-TC chips (v7x) can shard the parallel
    # axis; keep M a multiple of the f32 sublane (8); cap at 256 for the MXU.
    tile = min(256, -(-bc // 2))
    return -(-tile // 8) * 8


def decoder_forward(est_source, L, *, compute_dtype=jnp.float32):
    """Pallas TPU implementation of Decoder.forward.

    compute_dtype: dtype fed to the MXU for x and the pooling matrix.
      float32 (default) matches the float32 PyTorch reference to ~1e-6;
      bfloat16 halves x HBM/VMEM traffic and runs the MXU at native rate at
      the cost of ~1e-3 relative error (accuracy trade-off -- off by default).
      Accumulation is always float32.
    """
    B, C, N, K = est_source.shape
    assert L >= 2, "Decoder requires L >= 2 (overlap step = L // 2)"
    assert N >= L, "N must be >= L for AvgPool2d((1, L))"
    F = (N - L) // L + 1              # AvgPool output width (floor, no padding)
    step = L // 2
    T = step * (K - 1) + F            # overlap_and_add output length
    T_pad = max(128, ((T + 127) // 128) * 128)   # lane-dense output tile

    BC = B * C
    tile_bc = _choose_tile_bc(BC)
    num_tiles = pl.cdiv(BC, tile_bc)
    bc_pad = num_tiles * tile_bc

    # Wrapper-side layout plumbing: [B, C, N, K] -> [K, BC, N] so each frame k
    # is a leading-axis slab [TILE_BC, N] inside the kernel (no in-kernel
    # cross-lane transposes).  Zero-pad rows so the grid divides evenly.
    x = jnp.transpose(est_source, (3, 0, 1, 2)).reshape(K, BC, N)
    if bc_pad != BC:
        x = jnp.pad(x, ((0, 0), (0, bc_pad - BC), (0, 0)))
    x = x.astype(compute_dtype)

    p = _pool_matrix(N, L, F, jnp.dtype(compute_dtype).name)

    # VMEM budget: double-buffered x / out tiles + (tiny) pooling matrix,
    # clamped to 85% of the chip's real VMEM (v7x has only 64 MiB per core).
    isz = jnp.dtype(compute_dtype).itemsize
    est = (2 * K * tile_bc * N * isz          # x blocks (double-buffered)
           + 2 * tile_bc * T_pad * 4          # out blocks (double-buffered)
           + 2 * N * F * isz                  # pooling matrix (constant index_map)
           + (4 << 20))                       # slack for in-kernel temporaries
    try:
        vmem_cap = int(0.85 * pltpu.get_tpu_info().vmem_capacity_bytes)
    except Exception:
        vmem_cap = int(0.85 * (64 << 20))     # conservative: v7x per-TC VMEM
    vmem_limit = int(min(max(est, 32 << 20), vmem_cap))

    out = pl.pallas_call(
        functools.partial(_decoder_kernel, K=K, F=F, step=step, inv_L=1.0 / L),
        out_shape=jax.ShapeDtypeStruct((bc_pad, T_pad), jnp.float32),
        grid=(num_tiles,),
        in_specs=[
            pl.BlockSpec((K, tile_bc, N), lambda i: (0, i, 0)),
            # Constant index_map: Pallas fetches P once; it is tiny (N*F), so
            # default double-buffering costs negligible VMEM (the review's
            # "single-buffer the weight" item is moot now that the big fused W
            # no longer exists).
            pl.BlockSpec((N, F), lambda i: (0, 0)),
        ],
        out_specs=pl.BlockSpec((tile_bc, T_pad), lambda i: (i, 0)),
        compiler_params=pltpu.CompilerParams(
            dimension_semantics=("parallel",),
            vmem_limit_bytes=vmem_limit,
        ),
    )(x, p)

    return out[:BC, :T].reshape(B, C, T).astype(est_source.dtype)


def decoder_reference(est_source, L):
    """Pure-JAX reference matching the PyTorch forward exactly."""
    B, C, N, K = est_source.shape
    F = (N - L) // L + 1
    step = L // 2
    T = step * (K - 1) + F
    x = jnp.transpose(est_source, (0, 1, 3, 2))[:, :, :, :F * L]    # [B,C,K,F*L]
    pooled = x.reshape(B, C, K, F, L).mean(axis=-1)                 # [B,C,K,F]
    out = jnp.zeros((B, C, T), jnp.float32)
    for k in range(K):
        out = out.at[:, :, k * step:k * step + F].add(pooled[:, :, k, :])
    return out


if __name__ == "__main__":
    # Small shapes consistent with the module: B=2 mixtures, C=2 speakers,
    # N=32 encoder features, K=8 frames, L=4 (so F=8, step=2, T=22).
    B, C, N, K, L = 2, 2, 32, 8, 4
    key = jax.random.PRNGKey(0)
    est_source = jax.random.normal(key, (B, C, N, K), dtype=jnp.float32)

    out = decoder_forward(est_source, L)
    out = jax.block_until_ready(out)

    ref = decoder_reference(est_source, L)
    assert out.shape == (B, C, (L // 2) * (K - 1) + (N - L) // L + 1)
    assert jnp.allclose(out, ref, atol=1e-5, rtol=1e-5), "mismatch vs reference"

    print("KERNEL_OK")
</pallas_src>

<mosaic_0001>
module attributes {stable_mosaic.version = 11 : i64} {
  func.func @_decoder_kernel(%arg0: i32, %arg1: memref<8x4x32xf32, #tpu.memory_space<vmem>>, %arg2: memref<32x8xf32, #tpu.memory_space<vmem>>, %arg3: memref<4x128xf32, #tpu.memory_space<vmem>>) attributes {dimension_semantics = [#tpu.dimension_semantics<parallel>], iteration_bounds = array<i64: 1>, scalar_prefetch = 0 : i64, scratch_operands = 0 : i64, tpu.core_type = #tpu.core_type<tc>, window_params = [{transform_indices = @transform_0, window_bounds = array<i64: 8, 4, 32>}, {pipeline_mode = #tpu.pipeline_mode<synchronous>, transform_indices = @transform_1, window_bounds = array<i64: 32, 8>}, {transform_indices = @transform_2, window_bounds = array<i64: 4, 128>}]} {
    %cst = arith.constant 0.000000e+00 : f32
    %0 = vector.broadcast %cst : f32 to vector<4x128xf32>
    %c0 = arith.constant 0 : index
    %c0_0 = arith.constant 0 : index
    %1 = vector.load %arg3[%c0, %c0_0] : memref<4x128xf32, #tpu.memory_space<vmem>>, vector<4x128xf32>
    tpu.vector_store %arg3[%c0, %c0_0], %0 {strides = array<i32>} : memref<4x128xf32, #tpu.memory_space<vmem>>, vector<4x128xf32>,
    %c0_1 = arith.constant 0 : index
    %c0_2 = arith.constant 0 : index
    %2 = vector.load %arg2[%c0_1, %c0_2] : memref<32x8xf32, #tpu.memory_space<vmem>>, vector<32x8xf32>
    %c0_3 = arith.constant 0 : index
    %c0_4 = arith.constant 0 : index
    %c0_5 = arith.constant 0 : index
    %3 = vector.load %arg1[%c0_3, %c0_4, %c0_5] : memref<8x4x32xf32, #tpu.memory_space<vmem>>, vector<1x4x32xf32>
    %4 = vector.shape_cast %3 : vector<1x4x32xf32> to vector<4x32xf32>
    %cst_6 = arith.constant dense<0.000000e+00> : vector<4x8xf32>
    %5 = tpu.matmul %4, %2, %cst_6 {dimension_numbers = #tpu.dot_dimension_numbers<[1], [0], [0], [1], [0, 0, 1, 1], [], []>} : vector<4x32xf32>, vector<32x8xf32>, vector<4x8xf32> -> vector<4x8xf32>
    %c0_7 = arith.constant 0 : index
    %c0_8 = arith.constant 0 : index
    %6 = vector.load %arg3[%c0_7, %c0_8] : memref<4x128xf32, #tpu.memory_space<vmem>>, vector<4x8xf32>
    %7 = arith.addf %6, %5 : vector<4x8xf32>
    %c0_9 = arith.constant 0 : index
    %c0_10 = arith.constant 0 : index
    %8 = vector.load %arg3[%c0_9, %c0_10] : memref<4x128xf32, #tpu.memory_space<vmem>>, vector<4x8xf32>
    tpu.vector_store %arg3[%c0_9, %c0_10], %7 {strides = array<i32>} : memref<4x128xf32, #tpu.memory_space<vmem>>, vector<4x8xf32>,
    %c1 = arith.constant 1 : index
    %c0_11 = arith.constant 0 : index
    %c0_12 = arith.constant 0 : index
    %9 = vector.load %arg1[%c1, %c0_11, %c0_12] : memref<8x4x32xf32, #tpu.memory_space<vmem>>, vector<1x4x32xf32>
    %10 = vector.shape_cast %9 : vector<1x4x32xf32> to vector<4x32xf32>
    %cst_13 = arith.constant dense<0.000000e+00> : vector<4x8xf32>
    %11 = tpu.matmul %10, %2, %cst_13 {dimension_numbers = #tpu.dot_dimension_numbers<[1], [0], [0], [1], [0, 0, 1, 1], [], []>} : vector<4x32xf32>, vector<32x8xf32>, vector<4x8xf32> -> vector<4x8xf32>
    %c0_14 = arith.constant 0 : index
    %c2 = arith.constant 2 : index
    %12 = vector.load %arg3[%c0_14, %c2] : memref<4x128xf32, #tpu.memory_space<vmem>>, vector<4x8xf32>
    %13 = arith.addf %12, %11 : vector<4x8xf32>
    %c0_15 = arith.constant 0 : index
    %c2_16 = arith.constant 2 : index
    %14 = vector.load %arg3[%c0_15, %c2_16] : memref<4x128xf32, #tpu.memory_space<vmem>>, vector<4x8xf32>
    tpu.vector_store %arg3[%c0_15, %c2_16], %13 {strides = array<i32>} : memref<4x128xf32, #tpu.memory_space<vmem>>, vector<4x8xf32>,
    %c2_17 = arith.constant 2 : index
    %c0_18 = arith.constant 0 : index
    %c0_19 = arith.constant 0 : index
    %15 = vector.load %arg1[%c2_17, %c0_18, %c0_19] : memref<8x4x32xf32, #tpu.memory_space<vmem>>, vector<1x4x32xf32>
    %16 = vector.shape_cast %15 : vector<1x4x32xf32> to vector<4x32xf32>
    %cst_20 = arith.constant dense<0.000000e+00> : vector<4x8xf32>
    %17 = tpu.matmul %16, %2, %cst_20 {dimension_numbers = #tpu.dot_dimension_numbers<[1], [0], [0], [1], [0, 0, 1, 1], [], []>} : vector<4x32xf32>, vector<32x8xf32>, vector<4x8xf32> -> vector<4x8xf32>
    %c0_21 = arith.constant 0 : index
    %c4 = arith.constant 4 : index
    %18 = vector.load %arg3[%c0_21, %c4] : memref<4x128xf32, #tpu.memory_space<vmem>>, vector<4x8xf32>
    %19 = arith.addf %18, %17 : vector<4x8xf32>
    %c0_22 = arith.constant 0 : index
    %c4_23 = arith.constant 4 : index
    %20 = vector.load %arg3[%c0_22, %c4_23] : memref<4x128xf32, #tpu.memory_space<vmem>>, vector<4x8xf32>
    tpu.vector_store %arg3[%c0_22, %c4_23], %19 {strides = array<i32>} : memref<4x128xf32, #tpu.memory_space<vmem>>, vector<4x8xf32>,
    %c3 = arith.constant 3 : index
    %c0_24 = arith.constant 0 : index
    %c0_25 = arith.constant 0 : index
    %21 = vector.load %arg1[%c3, %c0_24, %c0_25] : memref<8x4x32xf32, #tpu.memory_space<vmem>>, vector<1x4x32xf32>
    %22 = vector.shape_cast %21 : vector<1x4x32xf32> to vector<4x32xf32>
    %cst_26 = arith.constant dense<0.000000e+00> : vector<4x8xf32>
    %23 = tpu.matmul %22, %2, %cst_26 {dimension_numbers = #tpu.dot_dimension_numbers<[1], [0], [0], [1], [0, 0, 1, 1], [], []>} : vector<4x32xf32>, vector<32x8xf32>, vector<4x8xf32> -> vector<4x8xf32>
    %c0_27 = arith.constant 0 : index
    %c6 = arith.constant 6 : index
    %24 = vector.load %arg3[%c0_27, %c6] : memref<4x128xf32, #tpu.memory_space<vmem>>, vector<4x8xf32>
    %25 = arith.addf %24, %23 : vector<4x8xf32>
    %c0_28 = arith.constant 0 : index
    %c6_29 = arith.constant 6 : index
    %26 = vector.load %arg3[%c0_28, %c6_29] : memref<4x128xf32, #tpu.memory_space<vmem>>, vector<4x8xf32>
    tpu.vector_store %arg3[%c0_28, %c6_29], %25 {strides = array<i32>} : memref<4x128xf32, #tpu.memory_space<vmem>>, vector<4x8xf32>,
    %c4_30 = arith.constant 4 : index
    %c0_31 = arith.constant 0 : index
    %c0_32 = arith.constant 0 : index
    %27 = vector.load %arg1[%c4_30, %c0_31, %c0_32] : memref<8x4x32xf32, #tpu.memory_space<vmem>>, vector<1x4x32xf32>
    %28 = vector.shape_cast %27 : vector<1x4x32xf32> to vector<4x32xf32>
    %cst_33 = arith.constant dense<0.000000e+00> : vector<4x8xf32>
    %29 = tpu.matmul %28, %2, %cst_33 {dimension_numbers = #tpu.dot_dimension_numbers<[1], [0], [0], [1], [0, 0, 1, 1], [], []>} : vector<4x32xf32>, vector<32x8xf32>, vector<4x8xf32> -> vector<4x8xf32>
    %c0_34 = arith.constant 0 : index
    %c8 = arith.constant 8 : index
    %30 = vector.load %arg3[%c0_34, %c8] : memref<4x128xf32, #tpu.memory_space<vmem>>, vector<4x8xf32>
    %31 = arith.addf %30, %29 : vector<4x8xf32>
    %c0_35 = arith.constant 0 : index
    %c8_36 = arith.constant 8 : index
    %32 = vector.load %arg3[%c0_35, %c8_36] : memref<4x128xf32, #tpu.memory_space<vmem>>, vector<4x8xf32>
    tpu.vector_store %arg3[%c0_35, %c8_36], %31 {strides = array<i32>} : memref<4x128xf32, #tpu.memory_space<vmem>>, vector<4x8xf32>,
    %c5 = arith.constant 5 : index
    %c0_37 = arith.constant 0 : index
    %c0_38 = arith.constant 0 : index
    %33 = vector.load %arg1[%c5, %c0_37, %c0_38] : memref<8x4x32xf32, #tpu.memory_space<vmem>>, vector<1x4x32xf32>
    %34 = vector.shape_cast %33 : vector<1x4x32xf32> to vector<4x32xf32>
    %cst_39 = arith.constant dense<0.000000e+00> : vector<4x8xf32>
    %35 = tpu.matmul %34, %2, %cst_39 {dimension_numbers = #tpu.dot_dimension_numbers<[1], [0], [0], [1], [0, 0, 1, 1], [], []>} : vector<4x32xf32>, vector<32x8xf32>, vector<4x8xf32> -> vector<4x8xf32>
    %c0_40 = arith.constant 0 : index
    %c10 = arith.constant 10 : index
    %36 = vector.load %arg3[%c0_40, %c10] : memref<4x128xf32, #tpu.memory_space<vmem>>, vector<4x8xf32>
    %37 = arith.addf %36, %35 : vector<4x8xf32>
    %c0_41 = arith.constant 0 : index
    %c10_42 = arith.constant 10 : index
    %38 = vector.load %arg3[%c0_41, %c10_42] : memref<4x128xf32, #tpu.memory_space<vmem>>, vector<4x8xf32>
    tpu.vector_store %arg3[%c0_41, %c10_42], %37 {strides = array<i32>} : memref<4x128xf32, #tpu.memory_space<vmem>>, vector<4x8xf32>,
    %c6_43 = arith.constant 6 : index
    %c0_44 = arith.constant 0 : index
    %c0_45 = arith.constant 0 : index
    %39 = vector.load %arg1[%c6_43, %c0_44, %c0_45] : memref<8x4x32xf32, #tpu.memory_space<vmem>>, vector<1x4x32xf32>
    %40 = vector.shape_cast %39 : vector<1x4x32xf32> to vector<4x32xf32>
    %cst_46 = arith.constant dense<0.000000e+00> : vector<4x8xf32>
    %41 = tpu.matmul %40, %2, %cst_46 {dimension_numbers = #tpu.dot_dimension_numbers<[1], [0], [0], [1], [0, 0, 1, 1], [], []>} : vector<4x32xf32>, vector<32x8xf32>, vector<4x8xf32> -> vector<4x8xf32>
    %c0_47 = arith.constant 0 : index
    %c12 = arith.constant 12 : index
    %42 = vector.load %arg3[%c0_47, %c12] : memref<4x128xf32, #tpu.memory_space<vmem>>, vector<4x8xf32>
    %43 = arith.addf %42, %41 : vector<4x8xf32>
    %c0_48 = arith.constant 0 : index
    %c12_49 = arith.constant 12 : index
    %44 = vector.load %arg3[%c0_48, %c12_49] : memref<4x128xf32, #tpu.memory_space<vmem>>, vector<4x8xf32>
    tpu.vector_store %arg3[%c0_48, %c12_49], %43 {strides = array<i32>} : memref<4x128xf32, #tpu.memory_space<vmem>>, vector<4x8xf32>,
    %c7 = arith.constant 7 : index
    %c0_50 = arith.constant 0 : index
    %c0_51 = arith.constant 0 : index
    %45 = vector.load %arg1[%c7, %c0_50, %c0_51] : memref<8x4x32xf32, #tpu.memory_space<vmem>>, vector<1x4x32xf32>
    %46 = vector.shape_cast %45 : vector<1x4x32xf32> to vector<4x32xf32>
    %cst_52 = arith.constant dense<0.000000e+00> : vector<4x8xf32>
    %47 = tpu.matmul %46, %2, %cst_52 {dimension_numbers = #tpu.dot_dimension_numbers<[1], [0], [0], [1], [0, 0, 1, 1], [], []>} : vector<4x32xf32>, vector<32x8xf32>, vector<4x8xf32> -> vector<4x8xf32>
    %c0_53 = arith.constant 0 : index
    %c14 = arith.constant 14 : index
    %48 = vector.load %arg3[%c0_53, %c14] : memref<4x128xf32, #tpu.memory_space<vmem>>, vector<4x8xf32>
    %49 = arith.addf %48, %47 : vector<4x8xf32>
    %c0_54 = arith.constant 0 : index
    %c14_55 = arith.constant 14 : index
    %50 = vector.load %arg3[%c0_54, %c14_55] : memref<4x128xf32, #tpu.memory_space<vmem>>, vector<4x8xf32>
    tpu.vector_store %arg3[%c0_54, %c14_55], %49 {strides = array<i32>} : memref<4x128xf32, #tpu.memory_space<vmem>>, vector<4x8xf32>,
    %c0_56 = arith.constant 0 : index
    %c0_57 = arith.constant 0 : index
    %51 = vector.load %arg3[%c0_56, %c0_57] : memref<4x128xf32, #tpu.memory_space<vmem>>, vector<4x128xf32>
    %cst_58 = arith.constant 2.500000e-01 : f32
    %52 = vector.broadcast %cst_58 : f32 to vector<4x128xf32>
    %53 = arith.mulf %51, %52 : vector<4x128xf32>
    %c0_59 = arith.constant 0 : index
    %c0_60 = arith.constant 0 : index
    %54 = vector.load %arg3[%c0_59, %c0_60] : memref<4x128xf32, #tpu.memory_space<vmem>>, vector<4x128xf32>
    tpu.vector_store %arg3[%c0_59, %c0_60], %53 {strides = array<i32>} : memref<4x128xf32, #tpu.memory_space<vmem>>, vector<4x128xf32>,
    return
  }
  func.func @transform_0(%arg0: i32) -> (i32, i32, i32) {
    %c0_i32 = arith.constant 0 : i32
    %c0_i32_0 = arith.constant 0 : i32
    %c0_i32_1 = arith.constant 0 : i32
    return %c0_i32, %arg0, %c0_i32_0 : i32, i32, i32
  }
  func.func @transform_1(%arg0: i32) -> (i32, i32) {
    %c0_i32 = arith.constant 0 : i32
    %c0_i32_0 = arith.constant 0 : i32
    %c0_i32_1 = arith.constant 0 : i32
    return %c0_i32, %c0_i32_0 : i32, i32
  }
  func.func @transform_2(%arg0: i32) -> (i32, i32) {
    %c0_i32 = arith.constant 0 : i32
    %c0_i32_0 = arith.constant 0 : i32
    return %arg0, %c0_i32 : i32, i32
  }
}

</mosaic_0001>

<llo_original>
// kernel: tpu_custom_call.1
$region0: #{tpu_custom_call.1}
  #allocation0 [shape = 'u32[]', space=smem, size = 0x4, offset = 0x4, fixed_abs, tag = 'smem constant byte address 0x4 - core index']
  #allocation1 [shape = 'u32[144,128]{1,0:T(1,128)}', space=vmem, size = 0x12000, scoped, tag = 'internal scratch']
  %s0 = inlined_call_operand.vmem [shape: f32[8,4,32], index: 0, kind: input, shape index: {}]
  %s1 = inlined_call_operand.vmem [shape: f32[32,8], index: 1, kind: input, shape index: {}]
  %s2 = inlined_call_operand.hbm [shape: f32[4,128], index: 2, kind: output, shape index: {}]
  %s3 = sld [smem:[#allocation0]]
  $region18: #{tpu_custom_call.1} parent=0
    _
  %s5 = ssub.s32 1, %s3
  %s6 = scalar_select 0, %s5, %s3
  $region1: #{tpu_custom_call.1} parent=0
    #allocation2 [shape = 'u8[2048]{0}', space=vmem, size = 0x800, scoped, tag = 'output window, operand 0, single buffered']
    #allocation3 [shape = 's32[1]{0}', space=sflag, size = 0x4, scoped, tag = 'scoped memory for tpu_custom_call.1']
    %7 = vsyncpa [#allocation3], 0
    // Predicated region
    $region2: #{tpu_custom_call.1} parent=1 // pred_check
      _
    $region3: #{tpu_custom_call.1} parent=1 // pred_check_branch
      %9 = sbr.rel (0) target = $region5
    $region4: #{tpu_custom_call.1} parent=1 // pred_region
      _
    $region5: #{tpu_custom_call.1} parent=1 // pred_fallthru
      _
    // Predicated region
    $region6: #{tpu_custom_call.1} parent=1 // pred_check
      _
    $region7: #{tpu_custom_call.1} parent=1 // pred_check_branch
      %11 = sbr.rel (0) target = $region9
    $region8: #{tpu_custom_call.1} parent=1 // pred_region
      _
    $region9: #{tpu_custom_call.1} parent=1 // pred_fallthru
      _
    %12 = vst [vmem:[#allocation2] sm:$0xf] 0.0
    %v13 = vld [vmem:[%s1] sm:$0xff]
    %v14 = vld [vmem:[%s1 + $0x8] sm:$0xff]
    %v15 = vld [vmem:[%s1 + $0x10] sm:$0xff]
    %v16 = vld [vmem:[%s1 + $0x18] sm:$0xff]
    %v17 = vld [vmem:[%s0] sm:$0xf]
    %vm18 = vcmask 261120
    %v20 = vsel %vm18, %v17, 0
    %22 = vmatprep.subr.mxu0 0.0
    %23 = vmatpush1.msra.mxu0 %v13
    %24 = vmatprep.subr.mxu0 0.0
    %25 = vmatpush1.msra.mxu0 %v14
    %26 = vmatprep.subr.mxu0 0.0
    %27 = vmatpush1.msra.mxu0 %v15
    %28 = vmatprep.subr.mxu0 0.0
    %29 = vmatpush1.msra.mxu0 %v16
    %30 = vmatprep.subr.mxu0 0.0
    %31 = vmatpush1.msra.mxu0 0.0
    %32 = vmatprep.subr.mxu0 0.0
    %33 = vmatpush1.msra.mxu0 0.0
    %34 = vmatprep.subr.mxu0 0.0
    %35 = vmatpush1.msra.mxu0 0.0
    %36 = vmatprep.subr.mxu0 0.0
    %37 = vmatpush1.msra.mxu0 0.0
    %38 = vmatprep.subr.mxu0 0.0
    %39 = vmatpush1.msra.mxu0 0.0
    %40 = vmatprep.subr.mxu0 0.0
    %41 = vmatpush1.msra.mxu0 0.0
    %42 = vmatprep.subr.mxu0 0.0
    %43 = vmatpush1.msra.mxu0 0.0
    %44 = vmatprep.subr.mxu0 0.0
    %45 = vmatpush1.msra.mxu0 0.0
    %46 = vmatprep.subr.mxu0 0.0
    %47 = vmatpush1.msra.mxu0 0.0
    %48 = vmatprep.subr.mxu0 0.0
    %49 = vmatpush1.msra.mxu0 0.0
    %50 = vmatprep.subr.mxu0 0.0
    %51 = vmatpush1.msra.mxu0 0.0
    %52 = vmatprep.subr.mxu0 0.0
    %53 = vmatpush1.msra.mxu0 0.0
    %54 = vmatprep.subr.mxu0 0.0
    %55 = vmatpush1.msra.mxu0 0.0
    %56 = vmatprep.subr.mxu0 0.0
    %57 = vmatpush1.msra.mxu0 0.0
    %58 = vmatprep.subr.mxu0 0.0
    %59 = vmatpush1.msra.mxu0 0.0
    %60 = vmatprep.subr.mxu0 0.0
    %61 = vmatpush1.msra.mxu0 0.0
    %62 = vmatprep.subr.mxu0 0.0
    %63 = vmatpush1.msra.mxu0 0.0
    %64 = vmatprep.subr.mxu0 0.0
    %65 = vmatpush1.msra.mxu0 0.0
    %66 = vmatprep.subr.mxu0 0.0
    %67 = vmatpush1.msra.mxu0 0.0
    %68 = vmatprep.subr.mxu0 0.0
    %69 = vmatpush1.msra.mxu0 0.0
    %70 = vmatprep.subr.mxu0 0.0
    %71 = vmatpush1.msra.mxu0 0.0
    %72 = vmatprep.subr.mxu0 0.0
    %73 = vmatpush1.msra.mxu0 0.0
    %74 = vmatprep.subr.mxu0 0.0
    %75 = vmatpush1.msra.mxu0 0.0
    %76 = vmatprep.subr.mxu0 0.0
    %77 = vmatpush1.msra.mxu0 0.0
    %78 = vmatprep.subr.mxu0 0.0
    %79 = vmatpush1.msra.mxu0 0.0
    %80 = vmatprep.subr.mxu0 0.0
    %81 = vmatpush1.msra.mxu0 0.0
    %82 = vmatprep.subr.mxu0 0.0
    %83 = vmatpush1.msra.mxu0 0.0
    %84 = vmatprep.subr.mxu0 0.0
    %85 = vmatpush1.msra.mxu0 0.0
    %86 = vmatprep.mubr.f32.mxu0 0.0
    %87 = vmatmul.mubr.f32.gmra.mrb[0].mxu0 %v20
    %v88 = vpop.f32.mrb[0].mxu0
    %v89 = vadd.f32 0.0, %v88
    %v90 = vpop.f32.mrb[0].mxu0
    %91 = vdwg.mxu0
    %v92 = vld [vmem:[#allocation2] sm:$0xf]
    %v93 = vadd.f32 %v92, %v89
    %vm94 = vcmask 60416
    %95 = vst.msk [vmem:[#allocation2] sm:$0xf] %vm94, %v93
    %s96 = scalar_lea.vmem %s0, 4
    %v97 = vld [vmem:[%s96] sm:$0xf]
    %v99 = vsel %vm18, %v97, 0
    %101 = vmatprep.subr.mxu0 0.0
    %102 = vmatpush1.msra.mxu0 %v13
    %103 = vmatprep.subr.mxu0 0.0
    %104 = vmatpush1.msra.mxu0 %v14
    %105 = vmatprep.subr.mxu0 0.0
    %106 = vmatpush1.msra.mxu0 %v15
    %107 = vmatprep.subr.mxu0 0.0
    %108 = vmatpush1.msra.mxu0 %v16
    %109 = vmatprep.subr.mxu0 0.0
    %110 = vmatpush1.msra.mxu0 0.0
    %111 = vmatprep.subr.mxu0 0.0
    %112 = vmatpush1.msra.mxu0 0.0
    %113 = vmatprep.subr.mxu0 0.0
    %114 = vmatpush1.msra.mxu0 0.0
    %115 = vmatprep.subr.mxu0 0.0
    %116 = vmatpush1.msra.mxu0 0.0
    %117 = vmatprep.subr.mxu0 0.0
    %118 = vmatpush1.msra.mxu0 0.0
    %119 = vmatprep.subr.mxu0 0.0
    %120 = vmatpush1.msra.mxu0 0.0
    %121 = vmatprep.subr.mxu0 0.0
    %122 = vmatpush1.msra.mxu0 0.0
    %123 = vmatprep.subr.mxu0 0.0
    %124 = vmatpush1.msra.mxu0 0.0
    %125 = vmatprep.subr.mxu0 0.0
    %126 = vmatpush1.msra.mxu0 0.0
    %127 = vmatprep.subr.mxu0 0.0
    %128 = vmatpush1.msra.mxu0 0.0
    %129 = vmatprep.subr.mxu0 0.0
    %130 = vmatpush1.msra.mxu0 0.0
    %131 = vmatprep.subr.mxu0 0.0
    %132 = vmatpush1.msra.mxu0 0.0
    %133 = vmatprep.subr.mxu0 0.0
    %134 = vmatpush1.msra.mxu0 0.0
    %135 = vmatprep.subr.mxu0 0.0
    %136 = vmatpush1.msra.mxu0 0.0
    %137 = vmatprep.subr.mxu0 0.0
    %138 = vmatpush1.msra.mxu0 0.0
    %139 = vmatprep.subr.mxu0 0.0
    %140 = vmatpush1.msra.mxu0 0.0
    %141 = vmatprep.subr.mxu0 0.0
    %142 = vmatpush1.msra.mxu0 0.0
    %143 = vmatprep.subr.mxu0 0.0
    %144 = vmatpush1.msra.mxu0 0.0
    %145 = vmatprep.subr.mxu0 0.0
    %146 = vmatpush1.msra.mxu0 0.0
    %147 = vmatprep.subr.mxu0 0.0
    %148 = vmatpush1.msra.mxu0 0.0
    %149 = vmatprep.subr.mxu0 0.0
    %150 = vmatpush1.msra.mxu0 0.0
    %151 = vmatprep.subr.mxu0 0.0
    %152 = vmatpush1.msra.mxu0 0.0
    %153 = vmatprep.subr.mxu0 0.0
    %154 = vmatpush1.msra.mxu0 0.0
    %155 = vmatprep.subr.mxu0 0.0
    %156 = vmatpush1.msra.mxu0 0.0
    %157 = vmatprep.subr.mxu0 0.0
    %158 = vmatpush1.msra.mxu0 0.0
    %159 = vmatprep.subr.mxu0 0.0
    %160 = vmatpush1.msra.mxu0 0.0
    %161 = vmatprep.subr.mxu0 0.0
    %162 = vmatpush1.msra.mxu0 0.0
    %163 = vmatprep.subr.mxu0 0.0
    %164 = vmatpush1.msra.mxu0 0.0
    %165 = vmatprep.mubr.f32.mxu0 0.0
    %166 = vmatmul.mubr.f32.gmra.mrb[0].mxu0 %v99
    %v167 = vpop.f32.mrb[0].mxu0
    %v168 = vadd.f32 0.0, %v167
    %v169 = vpop.f32.mrb[0].mxu0
    %170 = vdwg.mxu0
    %v171 = vld [vmem:[#allocation2] sm:$0xf]
    %173 = vrot.lane.b32.xlu0 %v168, 2
    %v174 = vpop.permute.xlu0 %173
    %v176 = vadd.f32 %v171, %v174
    %vm177 = vcmask 76816
    %178 = vst.msk [vmem:[#allocation2] sm:$0xf] %vm177, %v176
    %s179 = scalar_lea.vmem %s0, 8
    %v180 = vld [vmem:[%s179] sm:$0xf]
    %v182 = vsel %vm18, %v180, 0
    %184 = vmatprep.subr.mxu0 0.0
    %185 = vmatpush1.msra.mxu0 %v13
    %186 = vmatprep.subr.mxu0 0.0
    %187 = vmatpush1.msra.mxu0 %v14
    %188 = vmatprep.subr.mxu0 0.0
    %189 = vmatpush1.msra.mxu0 %v15
    %190 = vmatprep.subr.mxu0 0.0
    %191 = vmatpush1.msra.mxu0 %v16
    %192 = vmatprep.subr.mxu0 0.0
    %193 = vmatpush1.msra.mxu0 0.0
    %194 = vmatprep.subr.mxu0 0.0
    %195 = vmatpush1.msra.mxu0 0.0
    %196 = vmatprep.subr.mxu0 0.0
    %197 = vmatpush1.msra.mxu0 0.0
    %198 = vmatprep.subr.mxu0 0.0
    %199 = vmatpush1.msra.mxu0 0.0
    %200 = vmatprep.subr.mxu0 0.0
    %201 = vmatpush1.msra.mxu0 0.0
    %202 = vmatprep.subr.mxu0 0.0
    %203 = vmatpush1.msra.mxu0 0.0
    %204 = vmatprep.subr.mxu0 0.0
    %205 = vmatpush1.msra.mxu0 0.0
    %206 = vmatprep.subr.mxu0 0.0
    %207 = vmatpush1.msra.mxu0 0.0
    %208 = vmatprep.subr.mxu0 0.0
    %209 = vmatpush1.msra.mxu0 0.0
    %210 = vmatprep.subr.mxu0 0.0
    %211 = vmatpush1.msra.mxu0 0.0
    %212 = vmatprep.subr.mxu0 0.0
    %213 = vmatpush1.msra.mxu0 0.0
    %214 = vmatprep.subr.mxu0 0.0
    %215 = vmatpush1.msra.mxu0 0.0
    %216 = vmatprep.subr.mxu0 0.0
    %217 = vmatpush1.msra.mxu0 0.0
    %218 = vmatprep.subr.mxu0 0.0
    %219 = vmatpush1.msra.mxu0 0.0
    %220 = vmatprep.subr.mxu0 0.0
    %221 = vmatpush1.msra.mxu0 0.0
    %222 = vmatprep.subr.mxu0 0.0
    %223 = vmatpush1.msra.mxu0 0.0
    %224 = vmatprep.subr.mxu0 0.0
    %225 = vmatpush1.msra.mxu0 0.0
    %226 = vmatprep.subr.mxu0 0.0
    %227 = vmatpush1.msra.mxu0 0.0
    %228 = vmatprep.subr.mxu0 0.0
    %229 = vmatpush1.msra.mxu0 0.0
    %230 = vmatprep.subr.mxu0 0.0
    %231 = vmatpush1.msra.mxu0 0.0
    %232 = vmatprep.subr.mxu0 0.0
    %233 = vmatpush1.msra.mxu0 0.0
    %234 = vmatprep.subr.mxu0 0.0
    %235 = vmatpush1.msra.mxu0 0.0
    %236 = vmatprep.subr.mxu0 0.0
    %237 = vmatpush1.msra.mxu0 0.0
    %238 = vmatprep.subr.mxu0 0.0
    %239 = vmatpush1.msra.mxu0 0.0
    %240 = vmatprep.subr.mxu0 0.0
    %241 = vmatpush1.msra.mxu0 0.0
    %242 = vmatprep.subr.mxu0 0.0
    %243 = vmatpush1.msra.mxu0 0.0
    %244 = vmatprep.subr.mxu0 0.0
    %245 = vmatpush1.msra.mxu0 0.0
    %246 = vmatprep.subr.mxu0 0.0
    %247 = vmatpush1.msra.mxu0 0.0
    %248 = vmatprep.mubr.f32.mxu0 0.0
    %249 = vmatmul.mubr.f32.gmra.mrb[0].mxu0 %v182
    %v250 = vpop.f32.mrb[0].mxu0
    %v251 = vadd.f32 0.0, %v250
    %v252 = vpop.f32.mrb[0].mxu0
    %253 = vdwg.mxu0
    %v254 = vld [vmem:[#allocation2] sm:$0xf]
    %256 = vrot.lane.b32.xlu0 %v251, 4
    %v257 = vpop.permute.xlu0 %256
    %v259 = vadd.f32 %v254, %v257
    %vm260 = vcmask 93216
    %261 = vst.msk [vmem:[#allocation2] sm:$0xf] %vm260, %v259
    %s262 = scalar_lea.vmem %s0, 12
    %v263 = vld [vmem:[%s262] sm:$0xf]
    %v265 = vsel %vm18, %v263, 0
    %267 = vmatprep.subr.mxu0 0.0
    %268 = vmatpush1.msra.mxu0 %v13
    %269 = vmatprep.subr.mxu0 0.0
    %270 = vmatpush1.msra.mxu0 %v14
    %271 = vmatprep.subr.mxu0 0.0
    %272 = vmatpush1.msra.mxu0 %v15
    %273 = vmatprep.subr.mxu0 0.0
    %274 = vmatpush1.msra.mxu0 %v16
    %275 = vmatprep.subr.mxu0 0.0
    %276 = vmatpush1.msra.mxu0 0.0
    %277 = vmatprep.subr.mxu0 0.0
    %278 = vmatpush1.msra.mxu0 0.0
    %279 = vmatprep.subr.mxu0 0.0
    %280 = vmatpush1.msra.mxu0 0.0
    %281 = vmatprep.subr.mxu0 0.0
    %282 = vmatpush1.msra.mxu0 0.0
    %283 = vmatprep.subr.mxu0 0.0
    %284 = vmatpush1.msra.mxu0 0.0
    %285 = vmatprep.subr.mxu0 0.0
    %286 = vmatpush1.msra.mxu0 0.0
    %287 = vmatprep.subr.mxu0 0.0
    %288 = vmatpush1.msra.mxu0 0.0
    %289 = vmatprep.subr.mxu0 0.0
    %290 = vmatpush1.msra.mxu0 0.0
    %291 = vmatprep.subr.mxu0 0.0
    %292 = vmatpush1.msra.mxu0 0.0
    %293 = vmatprep.subr.mxu0 0.0
    %294 = vmatpush1.msra.mxu0 0.0
    %295 = vmatprep.subr.mxu0 0.0
    %296 = vmatpush1.msra.mxu0 0.0
    %297 = vmatprep.subr.mxu0 0.0
    %298 = vmatpush1.msra.mxu0 0.0
    %299 = vmatprep.subr.mxu0 0.0
    %300 = vmatpush1.msra.mxu0 0.0
    %301 = vmatprep.subr.mxu0 0.0
    %302 = vmatpush1.msra.mxu0 0.0
    %303 = vmatprep.subr.mxu0 0.0
    %304 = vmatpush1.msra.mxu0 0.0
    %305 = vmatprep.subr.mxu0 0.0
    %306 = vmatpush1.msra.mxu0 0.0
    %307 = vmatprep.subr.mxu0 0.0
    %308 = vmatpush1.msra.mxu0 0.0
    %309 = vmatprep.subr.mxu0 0.0
    %310 = vmatpush1.msra.mxu0 0.0
    %311 = vmatprep.subr.mxu0 0.0
    %312 = vmatpush1.msra.mxu0 0.0
    %313 = vmatprep.subr.mxu0 0.0
    %314 = vmatpush1.msra.mxu0 0.0
    %315 = vmatprep.subr.mxu0 0.0
    %316 = vmatpush1.msra.mxu0 0.0
    %317 = vmatprep.subr.mxu0 0.0
    %318 = vmatpush1.msra.mxu0 0.0
    %319 = vmatprep.subr.mxu0 0.0
    %320 = vmatpush1.msra.mxu0 0.0
    %321 = vmatprep.subr.mxu0 0.0
    %322 = vmatpush1.msra.mxu0 0.0
    %323 = vmatprep.subr.mxu0 0.0
    %324 = vmatpush1.msra.mxu0 0.0
    %325 = vmatprep.subr.mxu0 0.0
    %326 = vmatpush1.msra.mxu0 0.0
    %327 = vmatprep.subr.mxu0 0.0
    %328 = vmatpush1.msra.mxu0 0.0
    %329 = vmatprep.subr.mxu0 0.0
    %330 = vmatpush1.msra.mxu0 0.0
    %331 = vmatprep.mubr.f32.mxu0 0.0
    %332 = vmatmul.mubr.f32.gmra.mrb[0].mxu0 %v265
    %v333 = vpop.f32.mrb[0].mxu0
    %v334 = vadd.f32 0.0, %v333
    %v335 = vpop.f32.mrb[0].mxu0
    %336 = vdwg.mxu0
    %v337 = vld [vmem:[#allocation2] sm:$0xf]
    %339 = vrot.lane.b32.xlu0 %v334, 6
    %v340 = vpop.permute.xlu0 %339
    %v342 = vadd.f32 %v337, %v340
    %vm343 = vcmask 109616
    %344 = vst.msk [vmem:[#allocation2] sm:$0xf] %vm343, %v342
    %s345 = scalar_lea.vmem %s0, 16
    %v346 = vld [vmem:[%s345] sm:$0xf]
    %v348 = vsel %vm18, %v346, 0
    %350 = vmatprep.subr.mxu0 0.0
    %351 = vmatpush1.msra.mxu0 %v13
    %352 = vmatprep.subr.mxu0 0.0
    %353 = vmatpush1.msra.mxu0 %v14
    %354 = vmatprep.subr.mxu0 0.0
    %355 = vmatpush1.msra.mxu0 %v15
    %356 = vmatprep.subr.mxu0 0.0
    %357 = vmatpush1.msra.mxu0 %v16
    %358 = vmatprep.subr.mxu0 0.0
    %359 = vmatpush1.msra.mxu0 0.0
    %360 = vmatprep.subr.mxu0 0.0
    %361 = vmatpush1.msra.mxu0 0.0
    %362 = vmatprep.subr.mxu0 0.0
    %363 = vmatpush1.msra.mxu0 0.0
    %364 = vmatprep.subr.mxu0 0.0
    %365 = vmatpush1.msra.mxu0 0.0
    %366 = vmatprep.subr.mxu0 0.0
    %367 = vmatpush1.msra.mxu0 0.0
    %368 = vmatprep.subr.mxu0 0.0
    %369 = vmatpush1.msra.mxu0 0.0
    %370 = vmatprep.subr.mxu0 0.0
    %371 = vmatpush1.msra.mxu0 0.0
    %372 = vmatprep.subr.mxu0 0.0
    %373 = vmatpush1.msra.mxu0 0.0
    %374 = vmatprep.subr.mxu0 0.0
    %375 = vmatpush1.msra.mxu0 0.0
    %376 = vmatprep.subr.mxu0 0.0
    %377 = vmatpush1.msra.mxu0 0.0
    %378 = vmatprep.subr.mxu0 0.0
    %379 = vmatpush1.msra.mxu0 0.0
    %380 = vmatprep.subr.mxu0 0.0
    %381 = vmatpush1.msra.mxu0 0.0
    %382 = vmatprep.subr.mxu0 0.0
    %383 = vmatpush1.msra.mxu0 0.0
    %384 = vmatprep.subr.mxu0 0.0
    %385 = vmatpush1.msra.mxu0 0.0
    %386 = vmatprep.subr.mxu0 0.0
    %387 = vmatpush1.msra.mxu0 0.0
    %388 = vmatprep.subr.mxu0 0.0
    %389 = vmatpush1.msra.mxu0 0.0
    %390 = vmatprep.subr.mxu0 0.0
    %391 = vmatpush1.msra.mxu0 0.0
    %392 = vmatprep.subr.mxu0 0.0
    %393 = vmatpush1.msra.mxu0 0.0
    %394 = vmatprep.subr.mxu0 0.0
    %395 = vmatpush1.msra.mxu0 0.0
    %396 = vmatprep.subr.mxu0 0.0
    %397 = vmatpush1.msra.mxu0 0.0
    %398 = vmatprep.subr.mxu0 0.0
    %399 = vmatpush1.msra.mxu0 0.0
    %400 = vmatprep.subr.mxu0 0.0
    %401 = vmatpush1.msra.mxu0 0.0
    %402 = vmatprep.subr.mxu0 0.0
    %403 = vmatpush1.msra.mxu0 0.0
    %404 = vmatprep.subr.mxu0 0.0
    %405 = vmatpush1.msra.mxu0 0.0
    %406 = vmatprep.subr.mxu0 0.0
    %407 = vmatpush1.msra.mxu0 0.0
    %408 = vmatprep.subr.mxu0 0.0
    %409 = vmatpush1.msra.mxu0 0.0
    %410 = vmatprep.subr.mxu0 0.0
    %411 = vmatpush1.msra.mxu0 0.0
    %412 = vmatprep.subr.mxu0 0.0
    %413 = vmatpush1.msra.mxu0 0.0
    %414 = vmatprep.mubr.f32.mxu0 0.0
    %415 = vmatmul.mubr.f32.gmra.mrb[0].mxu0 %v348
    %v416 = vpop.f32.mrb[0].mxu0
    %v417 = vadd.f32 0.0, %v416
    %v418 = vpop.f32.mrb[0].mxu0
    %419 = vdwg.mxu0
    %v420 = vld [vmem:[#allocation2] sm:$0xf]
    %422 = vrot.lane.b32.xlu0 %v417, 8
    %v423 = vpop.permute.xlu0 %422
    %v425 = vadd.f32 %v420, %v423
    %vm426 = vcmask 126016
    %427 = vst.msk [vmem:[#allocation2] sm:$0xf] %vm426, %v425
    %s428 = scalar_lea.vmem %s0, 20
    %v429 = vld [vmem:[%s428] sm:$0xf]
    %v431 = vsel %vm18, %v429, 0
    %433 = vmatprep.subr.mxu0 0.0
    %434 = vmatpush1.msra.mxu0 %v13
    %435 = vmatprep.subr.mxu0 0.0
    %436 = vmatpush1.msra.mxu0 %v14
    %437 = vmatprep.subr.mxu0 0.0
    %438 = vmatpush1.msra.mxu0 %v15
    %439 = vmatprep.subr.mxu0 0.0
    %440 = vmatpush1.msra.mxu0 %v16
    %441 = vmatprep.subr.mxu0 0.0
    %442 = vmatpush1.msra.mxu0 0.0
    %443 = vmatprep.subr.mxu0 0.0
    %444 = vmatpush1.msra.mxu0 0.0
    %445 = vmatprep.subr.mxu0 0.0
    %446 = vmatpush1.msra.mxu0 0.0
    %447 = vmatprep.subr.mxu0 0.0
    %448 = vmatpush1.msra.mxu0 0.0
    %449 = vmatprep.subr.mxu0 0.0
    %450 = vmatpush1.msra.mxu0 0.0
    %451 = vmatprep.subr.mxu0 0.0
    %452 = vmatpush1.msra.mxu0 0.0
    %453 = vmatprep.subr.mxu0 0.0
    %454 = vmatpush1.msra.mxu0 0.0
    %455 = vmatprep.subr.mxu0 0.0
    %456 = vmatpush1.msra.mxu0 0.0
    %457 = vmatprep.subr.mxu0 0.0
    %458 = vmatpush1.msra.mxu0 0.0
    %459 = vmatprep.subr.mxu0 0.0
    %460 = vmatpush1.msra.mxu0 0.0
    %461 = vmatprep.subr.mxu0 0.0
    %462 = vmatpush1.msra.mxu0 0.0
    %463 = vmatprep.subr.mxu0 0.0
    %464 = vmatpush1.msra.mxu0 0.0
    %465 = vmatprep.subr.mxu0 0.0
    %466 = vmatpush1.msra.mxu0 0.0
    %467 = vmatprep.subr.mxu0 0.0
    %468 = vmatpush1.msra.mxu0 0.0
    %469 = vmatprep.subr.mxu0 0.0
    %470 = vmatpush1.msra.mxu0 0.0
    %471 = vmatprep.subr.mxu0 0.0
    %472 = vmatpush1.msra.mxu0 0.0
    %473 = vmatprep.subr.mxu0 0.0
    %474 = vmatpush1.msra.mxu0 0.0
    %475 = vmatprep.subr.mxu0 0.0
    %476 = vmatpush1.msra.mxu0 0.0
    %477 = vmatprep.subr.mxu0 0.0
    %478 = vmatpush1.msra.mxu0 0.0
    %479 = vmatprep.subr.mxu0 0.0
    %480 = vmatpush1.msra.mxu0 0.0
    %481 = vmatprep.subr.mxu0 0.0
    %482 = vmatpush1.msra.mxu0 0.0
    %483 = vmatprep.subr.mxu0 0.0
    %484 = vmatpush1.msra.mxu0 0.0
    %485 = vmatprep.subr.mxu0 0.0
    %486 = vmatpush1.msra.mxu0 0.0
    %487 = vmatprep.subr.mxu0 0.0
    %488 = vmatpush1.msra.mxu0 0.0
    %489 = vmatprep.subr.mxu0 0.0
    %490 = vmatpush1.msra.mxu0 0.0
    %491 = vmatprep.subr.mxu0 0.0
    %492 = vmatpush1.msra.mxu0 0.0
    %493 = vmatprep.subr.mxu0 0.0
    %494 = vmatpush1.msra.mxu0 0.0
    %495 = vmatprep.subr.mxu0 0.0
    %496 = vmatpush1.msra.mxu0 0.0
    %497 = vmatprep.mubr.f32.mxu0 0.0
    %498 = vmatmul.mubr.f32.gmra.mrb[0].mxu0 %v431
    %v499 = vpop.f32.mrb[0].mxu0
    %v500 = vadd.f32 0.0, %v499
    %v501 = vpop.f32.mrb[0].mxu0
    %502 = vdwg.mxu0
    %v503 = vld [vmem:[#allocation2] sm:$0xf]
    %505 = vrot.lane.b32.xlu0 %v500, 10
    %v506 = vpop.permute.xlu0 %505
    %v508 = vadd.f32 %v503, %v506
    %vm509 = vcmask 142416
    %510 = vst.msk [vmem:[#allocation2] sm:$0xf] %vm509, %v508
    %s511 = scalar_lea.vmem %s0, 24
    %v512 = vld [vmem:[%s511] sm:$0xf]
    %v514 = vsel %vm18, %v512, 0
    %516 = vmatprep.subr.mxu0 0.0
    %517 = vmatpush1.msra.mxu0 %v13
    %518 = vmatprep.subr.mxu0 0.0
    %519 = vmatpush1.msra.mxu0 %v14
    %520 = vmatprep.subr.mxu0 0.0
    %521 = vmatpush1.msra.mxu0 %v15
    %522 = vmatprep.subr.mxu0 0.0
    %523 = vmatpush1.msra.mxu0 %v16
    %524 = vmatprep.subr.mxu0 0.0
    %525 = vmatpush1.msra.mxu0 0.0
    %526 = vmatprep.subr.mxu0 0.0
    %527 = vmatpush1.msra.mxu0 0.0
    %528 = vmatprep.subr.mxu0 0.0
    %529 = vmatpush1.msra.mxu0 0.0
    %530 = vmatprep.subr.mxu0 0.0
    %531 = vmatpush1.msra.mxu0 0.0
    %532 = vmatprep.subr.mxu0 0.0
    %533 = vmatpush1.msra.mxu0 0.0
    %534 = vmatprep.subr.mxu0 0.0
    %535 = vmatpush1.msra.mxu0 0.0
    %536 = vmatprep.subr.mxu0 0.0
    %537 = vmatpush1.msra.mxu0 0.0
    %538 = vmatprep.subr.mxu0 0.0
    %539 = vmatpush1.msra.mxu0 0.0
    %540 = vmatprep.subr.mxu0 0.0
    %541 = vmatpush1.msra.mxu0 0.0
    %542 = vmatprep.subr.mxu0 0.0
    %543 = vmatpush1.msra.mxu0 0.0
    %544 = vmatprep.subr.mxu0 0.0
    %545 = vmatpush1.msra.mxu0 0.0
    %546 = vmatprep.subr.mxu0 0.0
    %547 = vmatpush1.msra.mxu0 0.0
    %548 = vmatprep.subr.mxu0 0.0
    %549 = vmatpush1.msra.mxu0 0.0
    %550 = vmatprep.subr.mxu0 0.0
    %551 = vmatpush1.msra.mxu0 0.0
    %552 = vmatprep.subr.mxu0 0.0
    %553 = vmatpush1.msra.mxu0 0.0
    %554 = vmatprep.subr.mxu0 0.0
    %555 = vmatpush1.msra.mxu0 0.0
    %556 = vmatprep.subr.mxu0 0.0
    %557 = vmatpush1.msra.mxu0 0.0
    %558 = vmatprep.subr.mxu0 0.0
    %559 = vmatpush1.msra.mxu0 0.0
    %560 = vmatprep.subr.mxu0 0.0
    %561 = vmatpush1.msra.mxu0 0.0
    %562 = vmatprep.subr.mxu0 0.0
    %563 = vmatpush1.msra.mxu0 0.0
    %564 = vmatprep.subr.mxu0 0.0
    %565 = vmatpush1.msra.mxu0 0.0
    %566 = vmatprep.subr.mxu0 0.0
    %567 = vmatpush1.msra.mxu0 0.0
    %568 = vmatprep.subr.mxu0 0.0
    %569 = vmatpush1.msra.mxu0 0.0
    %570 = vmatprep.subr.mxu0 0.0
    %571 = vmatpush1.msra.mxu0 0.0
    %572 = vmatprep.subr.mxu0 0.0
    %573 = vmatpush1.msra.mxu0 0.0
    %574 = vmatprep.subr.mxu0 0.0
    %575 = vmatpush1.msra.mxu0 0.0
    %576 = vmatprep.subr.mxu0 0.0
    %577 = vmatpush1.msra.mxu0 0.0
    %578 = vmatprep.subr.mxu0 0.0
    %579 = vmatpush1.msra.mxu0 0.0
    %580 = vmatprep.mubr.f32.mxu0 0.0
    %581 = vmatmul.mubr.f32.gmra.mrb[0].mxu0 %v514
    %v582 = vpop.f32.mrb[0].mxu0
    %v583 = vadd.f32 0.0, %v582
    %v584 = vpop.f32.mrb[0].mxu0
    %585 = vdwg.mxu0
    %v586 = vld [vmem:[#allocation2] sm:$0xf]
    %588 = vrot.lane.b32.xlu0 %v583, 12
    %v589 = vpop.permute.xlu0 %588
    %v591 = vadd.f32 %v586, %v589
    %vm592 = vcmask 158816
    %593 = vst.msk [vmem:[#allocation2] sm:$0xf] %vm592, %v591
    %s594 = scalar_lea.vmem %s0, 28
    %v595 = vld [vmem:[%s594] sm:$0xf]
    %v597 = vsel %vm18, %v595, 0
    %599 = vmatprep.subr.mxu0 0.0
    %600 = vmatpush1.msra.mxu0 %v13
    %601 = vmatprep.subr.mxu0 0.0
    %602 = vmatpush1.msra.mxu0 %v14
    %603 = vmatprep.subr.mxu0 0.0
    %604 = vmatpush1.msra.mxu0 %v15
    %605 = vmatprep.subr.mxu0 0.0
    %606 = vmatpush1.msra.mxu0 %v16
    %607 = vmatprep.subr.mxu0 0.0
    %608 = vmatpush1.msra.mxu0 0.0
    %609 = vmatprep.subr.mxu0 0.0
    %610 = vmatpush1.msra.mxu0 0.0
    %611 = vmatprep.subr.mxu0 0.0
    %612 = vmatpush1.msra.mxu0 0.0
    %613 = vmatprep.subr.mxu0 0.0
    %614 = vmatpush1.msra.mxu0 0.0
    %615 = vmatprep.subr.mxu0 0.0
    %616 = vmatpush1.msra.mxu0 0.0
    %617 = vmatprep.subr.mxu0 0.0
    %618 = vmatpush1.msra.mxu0 0.0
    %619 = vmatprep.subr.mxu0 0.0
    %620 = vmatpush1.msra.mxu0 0.0
    %621 = vmatprep.subr.mxu0 0.0
    %622 = vmatpush1.msra.mxu0 0.0
    %623 = vmatprep.subr.mxu0 0.0
    %624 = vmatpush1.msra.mxu0 0.0
    %625 = vmatprep.subr.mxu0 0.0
    %626 = vmatpush1.msra.mxu0 0.0
    %627 = vmatprep.subr.mxu0 0.0
    %628 = vmatpush1.msra.mxu0 0.0
    %629 = vmatprep.subr.mxu0 0.0
    %630 = vmatpush1.msra.mxu0 0.0
    %631 = vmatprep.subr.mxu0 0.0
    %632 = vmatpush1.msra.mxu0 0.0
    %633 = vmatprep.subr.mxu0 0.0
    %634 = vmatpush1.msra.mxu0 0.0
    %635 = vmatprep.subr.mxu0 0.0
    %636 = vmatpush1.msra.mxu0 0.0
    %637 = vmatprep.subr.mxu0 0.0
    %638 = vmatpush1.msra.mxu0 0.0
    %639 = vmatprep.subr.mxu0 0.0
    %640 = vmatpush1.msra.mxu0 0.0
    %641 = vmatprep.subr.mxu0 0.0
    %642 = vmatpush1.msra.mxu0 0.0
    %643 = vmatprep.subr.mxu0 0.0
    %644 = vmatpush1.msra.mxu0 0.0
    %645 = vmatprep.subr.mxu0 0.0
    %646 = vmatpush1.msra.mxu0 0.0
    %647 = vmatprep.subr.mxu0 0.0
    %648 = vmatpush1.msra.mxu0 0.0
    %649 = vmatprep.subr.mxu0 0.0
    %650 = vmatpush1.msra.mxu0 0.0
    %651 = vmatprep.subr.mxu0 0.0
    %652 = vmatpush1.msra.mxu0 0.0
    %653 = vmatprep.subr.mxu0 0.0
    %654 = vmatpush1.msra.mxu0 0.0
    %655 = vmatprep.subr.mxu0 0.0
    %656 = vmatpush1.msra.mxu0 0.0
    %657 = vmatprep.subr.mxu0 0.0
    %658 = vmatpush1.msra.mxu0 0.0
    %659 = vmatprep.subr.mxu0 0.0
    %660 = vmatpush1.msra.mxu0 0.0
    %661 = vmatprep.subr.mxu0 0.0
    %662 = vmatpush1.msra.mxu0 0.0
    %663 = vmatprep.mubr.f32.mxu0 0.0
    %664 = vmatmul.mubr.f32.gmra.mrb[0].mxu0 %v597
    %v665 = vpop.f32.mrb[0].mxu0
    %v666 = vadd.f32 0.0, %v665
    %v667 = vpop.f32.mrb[0].mxu0
    %668 = vdwg.mxu0
    %v669 = vld [vmem:[#allocation2] sm:$0xf]
    %671 = vrot.lane.b32.xlu0 %v666, 14
    %v672 = vpop.permute.xlu0 %671
    %v674 = vadd.f32 %v669, %v672
    %vm675 = vcmask 175216
    %676 = vst.msk [vmem:[#allocation2] sm:$0xf] %vm675, %v674
    %v677 = vld [vmem:[#allocation2] sm:$0xf]
    %v678 = vmul.f32 %v677, 0.25
    %679 = vst [vmem:[#allocation2] sm:$0xf] %v678
    // Predicated region
    $region10: #{tpu_custom_call.1} parent=1 // pred_check
      _
    $region11: #{tpu_custom_call.1} parent=1 // pred_check_branch
      %681 = sbr.rel (0) target = $region13
    $region12: #{tpu_custom_call.1} parent=1 // pred_region
      %s683 = ssub.s32 64, 64
      %684 = vsyncadd [#allocation3], %s683
      %s686 = sshll.u32 [#allocation2], 4
      %s687 = int_to_ptr.vmem [resolvable:$true] %s686
      %689 = dma.vmem_to_hbm [thread:$0]  %s687, 64, %s2, [#allocation3]
    $region13: #{tpu_custom_call.1} parent=1 // pred_fallthru
      _
    // Predicated region
    $region14: #{tpu_custom_call.1} parent=1 // pred_check
      _
    $region15: #{tpu_custom_call.1} parent=1 // pred_check_branch
      %691 = sbr.rel (0) target = $region17
    $region16: #{tpu_custom_call.1} parent=1 // pred_region
      %692 = dma.done [#allocation3], 64
    $region17: #{tpu_custom_call.1} parent=1 // pred_fallthru
      _
    %693 = vsyncpa [#allocation3], 1

</llo_original>
